<compile_context>
chip_gen: v5e
topology: v5e:2x2
jax: 0.10.0
libtpu: 0.0.40
codegen_flags: <defaults>
</compile_context>

<pallas_src>
import functools

import jax
import jax.numpy as jnp
import numpy as np
from jax.experimental import pallas as pl
from jax.experimental.pallas import tpu as pltpu


# --------------------------------------------------------------------------- setup
def build_sinusoidal_pe(max_len: int, d_model: int) -> jnp.ndarray:
    """Same math as the PyTorch module's registered `pe` buffer (plain JAX glue)."""
    position = jnp.arange(max_len, dtype=jnp.float32)[:, None]              # [L, 1]
    div_term = jnp.exp(
        jnp.arange(0, d_model, 2, dtype=jnp.float32) * (-np.log(10000.0) / d_model)
    )                                                                        # [D/2]
    pe = jnp.zeros((max_len, d_model), dtype=jnp.float32)
    pe = pe.at[:, 0::2].set(jnp.sin(position * div_term))
    pe = pe.at[:, 1::2].set(jnp.cos(position * div_term))
    return pe                                                                # [L, D]


def _threshold(p: float, nbits: int) -> int:
    """Integer t so that P(uniform nbits < t) == p; p == 1.0 drops everything."""
    return min(int(round(p * (1 << nbits))), 1 << nbits)


def _choose_lane_layout(S: int, D: int):
    """Fold (S, D) -> (M, L) rows with L a lane-dense multiple of 128 when possible."""
    if D % 128 == 0:
        return S, D
    F = S * D
    if F % 128 != 0:
        return S, D          # cannot be made lane-dense; fall back to masked stores
    best = 128
    for cand in range(128, min(F, 2048) + 1, 128):
        if F % cand == 0 and ((F // cand) % 8 == 0 or (F // best) % 8 != 0):
            best = cand      # prefer the widest L that keeps M a multiple of 8
    return F // best, best


def _choose_row_tile(M: int, L: int, step_bytes_per_elem: int,
                     budget_bytes: int, gran: int) -> int:
    """Largest `gran`-multiple divisor of M whose double-buffered step fits budget."""
    if M % gran != 0:
        return M             # full-extent block (always legal)
    max_rows = max(gran, budget_bytes // (L * step_bytes_per_elem))
    best = gran
    for t in range(gran, M + 1, gran):
        if M % t == 0 and t <= max_rows:
            best = t
    return best


# --------------------------------------------------------------------------- kernels
def _make_kernel(dropout_p: float, use_dropout: bool, prng_impl: str):
    if not use_dropout:
        def kernel(x_ref, pe_ref, o_ref):
            y = x_ref[...].astype(jnp.float32) + pe_ref[...].astype(jnp.float32)
            o_ref[...] = y.astype(o_ref.dtype)
        return kernel

    scale = np.float32(1.0 / (1.0 - dropout_p)) if dropout_p < 1.0 else np.float32(0.0)

    if prng_impl == "pallas":
        # Compare the top 24 random bits against a 24-bit threshold (signed-safe).
        thresh = np.int32(_threshold(dropout_p, 24))

        def kernel(seed_ref, x_ref, pe_ref, o_ref):
            # Distinct stream per (seq-tile, batch) grid cell.
            pltpu.prng_seed(seed_ref[0], pl.program_id(0), pl.program_id(1))
            bits = pltpu.bitcast(pltpu.prng_random_bits(x_ref.shape), jnp.uint32)
            keep = (bits >> jnp.uint32(8)).astype(jnp.int32) >= thresh
            y = x_ref[...].astype(jnp.float32) + pe_ref[...].astype(jnp.float32)
            o_ref[...] = jnp.where(keep, y * scale, jnp.float32(0.0)).astype(o_ref.dtype)
        return kernel

    # Host-bits fallback (uint16 -> zero-extend to int32 so the compare is signed-safe).
    thresh = np.int32(_threshold(dropout_p, 16))

    def kernel(x_ref, pe_ref, bits_ref, o_ref):
        keep = bits_ref[...].astype(jnp.int32) >= thresh
        y = x_ref[...].astype(jnp.float32) + pe_ref[...].astype(jnp.float32)
        o_ref[...] = jnp.where(keep, y * scale, jnp.float32(0.0)).astype(o_ref.dtype)
    return kernel


# --------------------------------------------------------------------------- wrapper
@functools.partial(jax.jit, static_argnames=("dropout_p", "training", "prng_impl",
                                              "tile_budget_bytes"))
def positional_encoding_forward(
    x,                       # [B, S, D]
    pe_full,                 # [max_len, D] float32 buffer (as in the module)
    key=None,                # PRNG key (only needed when training & dropout_p > 0)
    *,
    dropout_p: float = 0.1,
    training: bool = False,
    prng_impl: str = "auto",                       # "pallas" | "host" | "auto"
    tile_budget_bytes: int = 16 * 1024 * 1024,     # double-buffered per-step budget
):
    B, S, D = x.shape
    use_dropout = bool(training) and dropout_p > 0.0
    if prng_impl == "auto":
        prng_impl = "pallas" if jax.default_backend() == "tpu" else "host"
    if use_dropout and key is None:
        raise ValueError("training-mode dropout needs a PRNG key")

    # pe slice in x.dtype (halves pe traffic for bf16 activations); add runs in f32.
    pe = pe_full[:S, :].astype(x.dtype)                                      # [S, D]

    # Lane-dense layout: fold (S, D) -> (M, L) with L a multiple of 128 when possible.
    M, L = _choose_lane_layout(S, D)
    x2 = x.reshape(B, M, L)
    pe2 = pe.reshape(M, L)

    itm = x.dtype.itemsize
    host_bits = use_dropout and prng_impl == "host"
    # Per-element, per-step, double-buffered footprint: x + out + pe (+ uint16 bits).
    step_bpe = 2 * (3 * itm + (2 if host_bits else 0))

    # Sublane granularity: 8 for 32-bit tiles, 16 when a 16-bit bits tile rides along.
    gran = 16 if host_bits else 8
    if M % gran != 0 and M % 8 == 0:
        gran = 8

    # Ragged row count: pad up to granularity instead of a huge full-extent block.
    Mp = M
    if M % gran != 0 and M * L * step_bpe > tile_budget_bytes:
        Mp = (M + gran - 1) // gran * gran
        x2 = jnp.pad(x2, ((0, 0), (0, Mp - M), (0, 0)))
        pe2 = jnp.pad(pe2, ((0, Mp - M), (0, 0)))

    TS = _choose_row_tile(Mp, L, step_bpe, tile_budget_bytes, gran)
    n_s = Mp // TS

    kernel = _make_kernel(dropout_p, use_dropout, prng_impl)

    # Grid (seq_tiles, B): batch innermost so pe's block index is constant across
    # consecutive steps (Pallas skips its re-DMA); seq_tiles leads the grid for a
    # balanced 2-TensorCore split on v7x.
    use_prefetch = use_dropout and prng_impl == "pallas"
    if use_prefetch:
        x_map = lambda s, b, seed_ref: (b, s, 0)
        pe_map = lambda s, b, seed_ref: (s, 0)
    else:
        x_map = lambda s, b: (b, s, 0)
        pe_map = lambda s, b: (s, 0)
    x_spec = pl.BlockSpec((None, TS, L), x_map)
    pe_spec = pl.BlockSpec((TS, L), pe_map)

    in_specs = [x_spec, pe_spec]
    args = []
    num_prefetch = 0
    if use_prefetch:
        num_prefetch = 1
        args.append(jax.random.randint(key, (1,), 0, 2**31 - 1, dtype=jnp.int32))
    args += [x2, pe2]
    if host_bits:
        bits = jax.random.bits(key, (B, S, D), dtype=jnp.uint16).reshape(B, M, L)
        if Mp != M:
            bits = jnp.pad(bits, ((0, 0), (0, Mp - M), (0, 0)))
        in_specs.append(pl.BlockSpec((None, TS, L), x_map))
        args.append(bits)

    out = pl.pallas_call(
        kernel,
        out_shape=jax.ShapeDtypeStruct((B, Mp, L), x.dtype),
        grid_spec=pltpu.PrefetchScalarGridSpec(
            num_scalar_prefetch=num_prefetch,
            grid=(n_s, B),
            in_specs=in_specs,
            out_specs=x_spec,
        ),
        compiler_params=pltpu.CompilerParams(
            dimension_semantics=("parallel", "parallel"),
            vmem_limit_bytes=48 * 1024 * 1024,       # headroom under v7x's 64 MiB VMEM
        ),
    )(*args)

    if Mp != M:
        out = out[:, :M, :]
    return out.reshape(B, S, D)


# --------------------------------------------------------------------------- demo
if __name__ == "__main__":
    B, S, D, MAX_LEN = 2, 8, 32, 32     # small shapes consistent with the module
    P = 0.1

    root = jax.random.PRNGKey(0)
    kx, kdrop = jax.random.split(root)
    x = jax.random.normal(kx, (B, S, D), dtype=jnp.float32)
    pe_full = build_sinusoidal_pe(MAX_LEN, D)
    ref = np.asarray(x + pe_full[None, :S, :])

    # 1) Eval mode (dropout is identity): exact check against the reference.
    out = positional_encoding_forward(x, pe_full, kdrop, dropout_p=P, training=False)
    out = np.asarray(jax.block_until_ready(out))
    np.testing.assert_allclose(out, ref, rtol=1e-6, atol=1e-6)

    # 2) Training mode, host-bits fallback path: the mask is reproducible from the
    #    key, so it is checked exactly.
    #    TODO(synk): dropout mask cannot bit-match torch.nn.Dropout's RNG stream.
    out_tr = positional_encoding_forward(x, pe_full, kdrop, dropout_p=P,
                                         training=True, prng_impl="host")
    out_tr = np.asarray(jax.block_until_ready(out_tr))
    bits16 = np.asarray(jax.random.bits(kdrop, (B, S, D), dtype=jnp.uint16))
    keep = bits16.astype(np.int32) >= _threshold(P, 16)
    ref_tr = np.where(keep, ref * np.float32(1.0 / (1.0 - P)), np.float32(0.0))
    np.testing.assert_allclose(out_tr, ref_tr, rtol=1e-5, atol=1e-6)

    # 3) Training mode, fast in-kernel PRNG path (production default on TPU hardware).
    out_fast = None
    if jax.default_backend() == "tpu":
        try:
            out_fast = positional_encoding_forward(x, pe_full, kdrop, dropout_p=P,
                                                   training=True, prng_impl="pallas")
            out_fast = np.asarray(jax.block_until_ready(out_fast))
        except Exception:
            out_fast = None  # TODO(synk): backend lacks pltpu PRNG lowering (interpret).
    if out_fast is not None:
        kept = np.abs(out_fast) > 1e-6
        np.testing.assert_allclose(out_fast[kept],
                                   (ref * np.float32(1.0 / (1.0 - P)))[kept],
                                   rtol=1e-5, atol=1e-6)
        assert kept.mean() > 0.5        # ~90% of elements kept at p = 0.1

    # 4) Lane-dense multi-tile case (D multiple of 128, several sequence tiles),
    #    exercising the (seq_tiles, B) grid and pe reuse across the batch axis.
    B2, S2, D2 = 2, 64, 128
    x2 = jax.random.normal(jax.random.PRNGKey(1), (B2, S2, D2), dtype=jnp.float32)
    pe2 = build_sinusoidal_pe(S2, D2)
    out2 = positional_encoding_forward(x2, pe2, kdrop, dropout_p=P, training=False,
                                       tile_budget_bytes=64 * 1024)   # -> 16-row tiles
    out2 = np.asarray(jax.block_until_ready(out2))
    np.testing.assert_allclose(out2, np.asarray(x2 + pe2[None, :, :]),
                               rtol=1e-6, atol=1e-6)

    print("KERNEL_OK")
</pallas_src>

<mosaic_0001>
module attributes {stable_mosaic.version = 11 : i64} {
  func.func @kernel(%arg0: i32, %arg1: i32, %arg2: memref<1x1x256xf32, #tpu.memory_space<vmem>>, %arg3: memref<1x256xf32, #tpu.memory_space<vmem>>, %arg4: memref<1x1x256xf32, #tpu.memory_space<vmem>>) attributes {dimension_semantics = [#tpu.dimension_semantics<parallel>, #tpu.dimension_semantics<parallel>], iteration_bounds = array<i64: 1, 2>, scalar_prefetch = 0 : i64, scratch_operands = 0 : i64, tpu.core_type = #tpu.core_type<tc>, window_params = [{transform_indices = @transform_0, window_bounds = array<i64: 1, 1, 256>}, {transform_indices = @transform_1, window_bounds = array<i64: 1, 256>}, {transform_indices = @transform_2, window_bounds = array<i64: 1, 1, 256>}]} {
    %c0 = arith.constant 0 : index
    %c0_0 = arith.constant 0 : index
    %c0_1 = arith.constant 0 : index
    %0 = vector.load %arg2[%c0, %c0_0, %c0_1] : memref<1x1x256xf32, #tpu.memory_space<vmem>>, vector<1x1x256xf32>
    %1 = vector.shape_cast %0 : vector<1x1x256xf32> to vector<1x256xf32>
    %c0_2 = arith.constant 0 : index
    %c0_3 = arith.constant 0 : index
    %2 = vector.load %arg3[%c0_2, %c0_3] : memref<1x256xf32, #tpu.memory_space<vmem>>, vector<1x256xf32>
    %3 = arith.addf %1, %2 : vector<1x256xf32>
    %c0_4 = arith.constant 0 : index
    %c0_5 = arith.constant 0 : index
    %c0_6 = arith.constant 0 : index
    %4 = vector.load %arg4[%c0_4, %c0_5, %c0_6] : memref<1x1x256xf32, #tpu.memory_space<vmem>>, vector<1x1x256xf32>
    %5 = vector.shape_cast %4 : vector<1x1x256xf32> to vector<1x256xf32>
    %6 = vector.shape_cast %3 : vector<1x256xf32> to vector<1x1x256xf32>
    tpu.vector_store %arg4[%c0_4, %c0_5, %c0_6], %6 {strides = array<i32>} : memref<1x1x256xf32, #tpu.memory_space<vmem>>, vector<1x1x256xf32>,
    return
  }
  func.func @transform_0(%arg0: i32, %arg1: i32) -> (i32, i32, i32) {
    %c0_i32 = arith.constant 0 : i32
    %c0_i32_0 = arith.constant 0 : i32
    return %arg1, %arg0, %c0_i32 : i32, i32, i32
  }
  func.func @transform_1(%arg0: i32, %arg1: i32) -> (i32, i32) {
    %c0_i32 = arith.constant 0 : i32
    %c0_i32_0 = arith.constant 0 : i32
    return %arg0, %c0_i32 : i32, i32
  }
  func.func @transform_2(%arg0: i32, %arg1: i32) -> (i32, i32, i32) {
    %c0_i32 = arith.constant 0 : i32
    %c0_i32_0 = arith.constant 0 : i32
    return %arg1, %arg0, %c0_i32 : i32, i32, i32
  }
}

</mosaic_0001>

<llo_original>
// kernel: positional_encoding_forward.1
$region0: #{positional_encoding_forward.1}
  #allocation0 [shape = 'u32[]', space=smem, size = 0x4, offset = 0x4, fixed_abs, tag = 'smem constant byte address 0x4 - core index']
  #allocation1 [shape = 'u32[72,128]{1,0:T(1,128)}', space=vmem, size = 0x9000, scoped, tag = 'internal scratch']
  %s0 = inlined_call_operand.vmem [shape: f32[2,1,256], index: 0, kind: input, shape index: {}]
  %s1 = inlined_call_operand.vmem [shape: f32[1,256], index: 1, kind: input, shape index: {}]
  %s2 = inlined_call_operand.vmem [shape: f32[2,1,256], index: 2, kind: output, shape index: {}]
  %s3 = sld [smem:[#allocation0]]
  $region41: #{positional_encoding_forward.1} parent=0
    _
  %s5 = ssub.s32 1, %s3
  %s6 = scalar_select 0, %s5, %s3
  loop: start=0, step=1, limit=4
  $region2: #{positional_encoding_forward.1} parent=0 // loop_pre_header
    _
  $region3: #{positional_encoding_forward.1} parent=0 // loop_header
    %s8 = sphi 0, %s12
    %p9 = scmp.ge.s32.totalorder %s8, 4
    %s15 = sphi 0, %s27
    %s16 = sphi 0, %s23
    %s17 = sphi 0, %s15
    %s18 = sphi 0, %s16
    %s19 = sphi 0, %s17
    %s20 = sphi 0, %s18
    %s32 = sphi 0, %s34
    %s35 = sphi 0, %s32
    %s36 = sphi 0, %s35
    %s52 = sphi 0, %s36
    %s58 = sphi 0, %s60
    %s61 = sphi 0, %s58
    %s62 = sphi 0, %s61
    %s78 = sphi 0, %s62
    %s86 = sphi 0, %s88
    %s89 = sphi 0, %s86
    %s90 = sphi 0, %s89
    %s106 = sphi 0, %s90
  $region4: #{positional_encoding_forward.1} parent=0 // loop_header_branch
    %11 = sbr.rel (%p9) target = $region8
  $region5: #{positional_encoding_forward.1} parent=0 // loop_body
    %s13 = ssub.s32 %s8, 1
    %s14 = ssub.s32 %s8, 2
    %s21 = sadd.s32 1, %s16
    %p22 = scmp.ge.s32.totalorder %s21, 2
    %s23 = scalar_select %p22, 0, %s21
    %s24 = sadd.s32 1, %s15
    %s25 = scalar_select %p22, %s24, %s15
    %p26 = scmp.ge.s32.totalorder %s25, 1
    %s27 = scalar_select %p26, 0, %s25
    %s28 = ssub.s32 %s16, %s23
    %s29 = ssub.s32 %s15, %s27
    %s30 = sor.u32 %s28, %s29
    %p31 = scmp.eq.s32.totalorder %s30, 0
    %s33 = sadd.s32 %s32, 1
    %s34 = scalar_select %p31, %s32, %s33
    %p37 = pneg %p31
    %p38 = scmp.eq.s32.totalorder %s8, 1
    %p39 = por %p37, %p38
    %p40 = scmp.ne.s32.totalorder %s32, %s35
    %p41 = scmp.eq.s32.totalorder %s8, 0
    %p42 = por %p40, %p41
    %p43 = scmp.ne.s32.totalorder %s32, %s35
    %p44 = scmp.eq.s32.totalorder %s13, 1
    %p45 = por %p43, %p44
    %p46 = scmp.ne.s32.totalorder %s35, %s36
    %p47 = scmp.eq.s32.totalorder %s13, 0
    %p48 = por %p46, %p47
    %p49 = scmp.ne.s32.totalorder %s35, %s36
    %p50 = scmp.eq.s32.totalorder %s14, 1
    %p51 = por %p49, %p50
    %p53 = scmp.ne.s32.totalorder %s36, %s52
    %p54 = scmp.eq.s32.totalorder %s14, 0
    %p55 = por %p53, %p54
    %s56 = ssub.s32 %s15, %s27
    %p57 = scmp.eq.s32.totalorder %s56, 0
    %s59 = sadd.s32 %s58, 1
    %s60 = scalar_select %p57, %s58, %s59
    %p63 = pneg %p57
    %p64 = scmp.eq.s32.totalorder %s8, 1
    %p65 = por %p63, %p64
    %p66 = scmp.ne.s32.totalorder %s58, %s61
    %p67 = scmp.eq.s32.totalorder %s8, 0
    %p68 = por %p66, %p67
    %p69 = scmp.ne.s32.totalorder %s58, %s61
    %p70 = scmp.eq.s32.totalorder %s13, 1
    %p71 = por %p69, %p70
    %p72 = scmp.ne.s32.totalorder %s61, %s62
    %p73 = scmp.eq.s32.totalorder %s13, 0
    %p74 = por %p72, %p73
    %p75 = scmp.ne.s32.totalorder %s61, %s62
    %p76 = scmp.eq.s32.totalorder %s14, 1
    %p77 = por %p75, %p76
    %p79 = scmp.ne.s32.totalorder %s62, %s78
    %p80 = scmp.eq.s32.totalorder %s14, 0
    %p81 = por %p79, %p80
    %s82 = ssub.s32 %s16, %s23
    %s83 = ssub.s32 %s15, %s27
    %s84 = sor.u32 %s82, %s83
    %p85 = scmp.eq.s32.totalorder %s84, 0
    %s87 = sadd.s32 %s86, 1
    %s88 = scalar_select %p85, %s86, %s87
    %p91 = pneg %p85
    %p92 = scmp.eq.s32.totalorder %s8, 1
    %p93 = por %p91, %p92
    %p94 = scmp.ne.s32.totalorder %s86, %s89
    %p95 = scmp.eq.s32.totalorder %s8, 0
    %p96 = por %p94, %p95
    %p97 = scmp.ne.s32.totalorder %s86, %s89
    %p98 = scmp.eq.s32.totalorder %s13, 1
    %p99 = por %p97, %p98
    %p100 = scmp.ne.s32.totalorder %s89, %s90
    %p101 = scmp.eq.s32.totalorder %s13, 0
    %p102 = por %p100, %p101
    %p103 = scmp.ne.s32.totalorder %s89, %s90
    %p104 = scmp.eq.s32.totalorder %s14, 1
    %p105 = por %p103, %p104
    %p107 = scmp.ne.s32.totalorder %s90, %s106
    %p108 = scmp.eq.s32.totalorder %s14, 0
    %p109 = por %p107, %p108
    %p110 = scmp.le.s32.totalorder 1, %s8
    %p111 = scmp.lt.s32.totalorder %s8, 3
    %p112 = pnand %p110, %p111
    %p113 = pneg %p112
    // Predicated region
    $region9: #{positional_encoding_forward.1} parent=5 // pred_check
      _
    $region10: #{positional_encoding_forward.1} parent=5 // pred_check_branch
      %115 = sbr.rel (%p112) target = $region12
    $region11: #{positional_encoding_forward.1} parent=5 // pred_region
      %s116 = ssub.s32 %s8, 1
      // Predicated region
      $region13: #{positional_encoding_forward.1} parent=11 // pred_check
        %p117 = pneg %p74
      $region14: #{positional_encoding_forward.1} parent=11 // pred_check_branch
        %119 = sbr.rel (%p117) target = $region16
      $region15: #{positional_encoding_forward.1} parent=11 // pred_region
        %p120 = scmp.lt.s32.totalorder %s17, 0
        %s121 = scalar_select %p120, %s17, 0
        %s122 = smul.addr %s121, 2
        %s123 = scalar_lea.vmem %s1, %s122
      $region16: #{positional_encoding_forward.1} parent=11 // pred_fallthru
        _
    $region12: #{positional_encoding_forward.1} parent=5 // pred_fallthru
      _
    %p124 = scmp.lt.s32.totalorder %s8, 2
    // Predicated region
    $region17: #{positional_encoding_forward.1} parent=5 // pred_check
      %p125 = pneg %p124
    $region18: #{positional_encoding_forward.1} parent=5 // pred_check_branch
      %127 = sbr.rel (%p125) target = $region20
    $region19: #{positional_encoding_forward.1} parent=5 // pred_region
      // Predicated region
      $region21: #{positional_encoding_forward.1} parent=19 // pred_check
        %p128 = pneg %p42
      $region22: #{positional_encoding_forward.1} parent=19 // pred_check_branch
        %130 = sbr.rel (%p128) target = $region24
      $region23: #{positional_encoding_forward.1} parent=19 // pred_region
        %p131 = scmp.lt.s32.totalorder %s16, 1
        %s132 = scalar_select %p131, %s16, 1
        %p133 = scmp.lt.s32.totalorder %s15, 0
        %s134 = scalar_select %p133, %s15, 0
        %s135 = smul.addr %s134, 2
        %s136 = smul.addr %s132, 2
        %s137 = sadd.s32 %s135, %s136
        %s138 = scalar_lea.vmem %s0, %s137
      $region24: #{positional_encoding_forward.1} parent=19 // pred_fallthru
        _
    $region20: #{positional_encoding_forward.1} parent=5 // pred_fallthru
      _
    %p139 = scmp.le.s32.totalorder 1, %s8
    %p140 = scmp.lt.s32.totalorder %s8, 3
    %p141 = pnand %p139, %p140
    %p142 = pneg %p141
    // Predicated region
    $region25: #{positional_encoding_forward.1} parent=5 // pred_check
      _
    $region26: #{positional_encoding_forward.1} parent=5 // pred_check_branch
      %144 = sbr.rel (%p141) target = $region28
    $region27: #{positional_encoding_forward.1} parent=5 // pred_region
      %s145 = ssub.s32 %s8, 1
      %p146 = scmp.lt.s32.totalorder %s18, 1
      %s147 = scalar_select %p146, %s18, 1
      %p148 = scmp.lt.s32.totalorder %s17, 0
      %s149 = scalar_select %p148, %s17, 0
      %s150 = smul.addr %s149, 2
      %s151 = smul.addr %s147, 2
      %s152 = sadd.s32 %s150, %s151
      %s153 = scalar_lea.vmem %s0, %s152
      %p154 = pneg %p48
      %p155 = pneg %p45
      %p156 = scmp.lt.s32.totalorder %s17, 0
      %s157 = scalar_select %p156, %s17, 0
      %s158 = smul.addr %s157, 2
      %s159 = scalar_lea.vmem %s1, %s158
      %p160 = pneg %p74
      %p161 = pneg %p71
      %p162 = pneg %p102
      %p163 = pneg %p99
      %p164 = scmp.lt.s32.totalorder %s18, 1
      %s165 = scalar_select %p164, %s18, 1
      %p166 = scmp.lt.s32.totalorder %s17, 0
      %s167 = scalar_select %p166, %s17, 0
      %s168 = smul.addr %s167, 2
      %s169 = smul.addr %s165, 2
      %s170 = sadd.s32 %s168, %s169
      %s171 = scalar_lea.vmem %s2, %s170
      %p172 = scmp.lt.s32.totalorder %s18, 1
      %s173 = scalar_select %p172, %s18, 1
      %p174 = scmp.lt.s32.totalorder %s17, 0
      %s175 = scalar_select %p174, %s17, 0
      %s176 = smul.addr %s175, 2
      %s177 = smul.addr %s173, 2
      %s178 = sadd.s32 %s176, %s177
      %s179 = scalar_lea.vmem %s0, %s178
      %p180 = scmp.lt.s32.totalorder %s17, 0
      %s181 = scalar_select %p180, %s17, 0
      %s182 = smul.addr %s181, 2
      %s183 = scalar_lea.vmem %s1, %s182
      %p184 = scmp.lt.s32.totalorder %s18, 1
      %s185 = scalar_select %p184, %s18, 1
      %p186 = scmp.lt.s32.totalorder %s17, 0
      %s187 = scalar_select %p186, %s17, 0
      %s188 = smul.addr %s187, 2
      %s189 = smul.addr %s185, 2
      %s190 = sadd.s32 %s188, %s189
      %s191 = scalar_lea.vmem %s2, %s190
      %v192 = vld [vmem:[%s179] sm:$0x3]
      %v193 = vld [vmem:[%s183] sm:$0x3]
      %v194 = vadd.f32 %v192, %v193
      %v195 = vlaneseq
      %vm196 = vcmp.ge.s32.totalorder %v195, 0
      %vm197 = vcmp.lt.s32.totalorder %v195, 256
      %vm198 = vmand %vm196, %vm197
      %199 = vst.msk [vmem:[%s191] sm:$0x3] %vm198, %v194
      %p200 = scmp.lt.s32.totalorder %s18, 1
      %s201 = scalar_select %p200, %s18, 1
      %p202 = scmp.lt.s32.totalorder %s17, 0
      %s203 = scalar_select %p202, %s17, 0
      %s204 = smul.addr %s203, 2
      %s205 = smul.addr %s201, 2
      %s206 = sadd.s32 %s204, %s205
      %s207 = scalar_lea.vmem %s2, %s206
      // Predicated region
      $region29: #{positional_encoding_forward.1} parent=27 // pred_check
        %p208 = pneg %p99
      $region30: #{positional_encoding_forward.1} parent=27 // pred_check_branch
        %210 = sbr.rel (%p208) target = $region32
      $region31: #{positional_encoding_forward.1} parent=27 // pred_region
        _
      $region32: #{positional_encoding_forward.1} parent=27 // pred_fallthru
        _
    $region28: #{positional_encoding_forward.1} parent=5 // pred_fallthru
      _
    %p211 = scmp.le.s32.totalorder 2, %s8
    // Predicated region
    $region33: #{positional_encoding_forward.1} parent=5 // pred_check
      %p212 = pneg %p211
    $region34: #{positional_encoding_forward.1} parent=5 // pred_check_branch
      %214 = sbr.rel (%p212) target = $region36
    $region35: #{positional_encoding_forward.1} parent=5 // pred_region
      %s215 = ssub.s32 %s8, 2
      // Predicated region
      $region37: #{positional_encoding_forward.1} parent=35 // pred_check
        %p216 = pneg %p105
      $region38: #{positional_encoding_forward.1} parent=35 // pred_check_branch
        %218 = sbr.rel (%p216) target = $region40
      $region39: #{positional_encoding_forward.1} parent=35 // pred_region
        %p219 = scmp.lt.s32.totalorder %s20, 1
        %s220 = scalar_select %p219, %s20, 1
        %p221 = scmp.lt.s32.totalorder %s19, 0
        %s222 = scalar_select %p221, %s19, 0
        %s223 = smul.addr %s222, 2
        %s224 = smul.addr %s220, 2
        %s225 = sadd.s32 %s223, %s224
        %s226 = scalar_lea.vmem %s2, %s225
      $region40: #{positional_encoding_forward.1} parent=35 // pred_fallthru
        _
    $region36: #{positional_encoding_forward.1} parent=5 // pred_fallthru
      _
  $region6: #{positional_encoding_forward.1} parent=0 // loop_footer
    %s12 = sadd.s32 1, %s8
  $region7: #{positional_encoding_forward.1} parent=0 // loop_footer_branch
    %7 = sbr.rel target = $region3
  $region8: #{positional_encoding_forward.1} parent=0 // loop_exit
    _

</llo_original>
